<compile_context>
chip_gen: v7x
topology: tpu7x:2x2x1
jax: 0.10.0
libtpu: 0.0.40
codegen_flags: <defaults>
</compile_context>

<pallas_src>
import functools

import jax
import jax.numpy as jnp
from jax.experimental import pallas as pl
from jax.experimental.pallas import tpu as pltpu


def _to_image_kernel(H, W, x_ref, w_ref, b_ref, o_ref, xp_ref, p_ref):
    """One image per grid step. Channel-major, spatial flattened on lanes.

    x_ref : (Cin, H*W)            input image, lane-dense
    w_ref : (Cout, 9*Cin)         weights, K ordered (kh, kw, ci)
    b_ref : (Cout, 1)             bias
    o_ref : (Cout, H*W)           output, lane-dense
    xp_ref: (Cin, H*W + 2*(W+1))  scratch: flat spatially-padded image
    p_ref : (9*Cin, H*W)          scratch: im2col patch matrix
    """
    Cin, HW = x_ref.shape
    pad = W + 1

    # In-kernel zero padding: zero the two halo strips, copy the interior.
    # (Done every step so it is correct even when the parallel batch axis is
    #  split across TensorCores, each with its own scratch instance.)
    xp_ref[:, :pad] = jnp.zeros((Cin, pad), jnp.float32)
    xp_ref[:, pad + HW:pad + HW + pad] = jnp.zeros((Cin, pad), jnp.float32)
    xp_ref[:, pad:pad + HW] = x_ref[...]

    # Column index of every flattened pixel (to mask row-wrap for dw = +-1).
    col = jax.lax.broadcasted_iota(jnp.int32, (Cin, HW), 1) % W

    # im2col: 9 statically shifted lane-dense views -> rows of (9*Cin, H*W).
    for kh in range(3):
        for kw in range(3):
            dh, dw = kh - 1, kw - 1
            start = pad + dh * W + dw          # static lane offset, 0..2*(W+1)
            t = xp_ref[:, start:start + HW]    # (Cin, H*W)
            if dw == -1:                       # left neighbor: w=0 column invalid
                t = jnp.where(col >= 1, t, 0.0)
            elif dw == 1:                      # right neighbor: w=W-1 column invalid
                t = jnp.where(col <= W - 2, t, 0.0)
            tap = kh * 3 + kw
            p_ref[tap * Cin:(tap + 1) * Cin, :] = t

    # Single fused matmul: (Cout, 9*Cin) @ (9*Cin, H*W) -> (Cout, H*W).
    out = jnp.dot(w_ref[...], p_ref[...], preferred_element_type=jnp.float32)
    out = out + b_ref[...]                      # (Cout, 1) broadcasts over lanes
    out = jnp.where(out >= 0, out, 0.2 * out)   # LeakyReLU(negative_slope=0.2)
    o_ref[...] = out.astype(o_ref.dtype)


def to_image(x_nchw, weight_oihw, bias):
    """Pallas equivalent of ToImage.forward.

    x_nchw:      (N, Cin, H, W)    float32
    weight_oihw: (Cout, Cin, 3, 3) float32  (PyTorch Conv2d layout)
    bias:        (Cout,)           float32
    returns:     (N, Cout, H, W)   float32
    """
    N, Cin, H, W = x_nchw.shape
    Cout = weight_oihw.shape[0]
    HW = H * W

    # Free reshape (contiguous dims merge) -- no transpose, no pad in HBM.
    x_flat = x_nchw.reshape(N, Cin, HW)
    # Tiny (Cout*Cin*9 elements) weight relayout: K ordered (kh, kw, ci).
    w_mat = jnp.transpose(weight_oihw, (0, 2, 3, 1)).reshape(Cout, 9 * Cin)
    b_col = bias.reshape(Cout, 1)

    kernel = functools.partial(_to_image_kernel, H, W)

    out_flat = pl.pallas_call(
        kernel,
        out_shape=jax.ShapeDtypeStruct((N, Cout, HW), x_nchw.dtype),
        grid_spec=pltpu.PrefetchScalarGridSpec(
            num_scalar_prefetch=0,
            grid=(N,),
            in_specs=[
                pl.BlockSpec((pl.Squeezed(), Cin, HW), lambda n: (n, 0, 0)),
                pl.BlockSpec((Cout, 9 * Cin), lambda n: (0, 0)),
                pl.BlockSpec((Cout, 1), lambda n: (0, 0)),
            ],
            out_specs=pl.BlockSpec((pl.Squeezed(), Cout, HW),
                                   lambda n: (n, 0, 0)),
            scratch_shapes=[
                pltpu.VMEM((Cin, HW + 2 * (W + 1)), jnp.float32),
                pltpu.VMEM((9 * Cin, HW), jnp.float32),
            ],
        ),
        compiler_params=pltpu.CompilerParams(
            dimension_semantics=("parallel",)),
    )(x_flat, w_mat, b_col)

    # Already channel-major: plain reshape, no transpose.
    return out_flat.reshape(N, Cout, H, W)


def _reference(x_nchw, weight_oihw, bias):
    """Pure-JAX reference matching nn.Conv2d(pad=1) + LeakyReLU(0.2)."""
    y = jax.lax.conv_general_dilated(
        x_nchw, weight_oihw,
        window_strides=(1, 1),
        padding=((1, 1), (1, 1)),
        dimension_numbers=("NCHW", "OIHW", "NCHW"))
    y = y + bias.reshape(1, -1, 1, 1)
    return jnp.where(y >= 0, y, 0.2 * y)


if __name__ == "__main__":
    key = jax.random.PRNGKey(0)
    k_x, k_w, k_b = jax.random.split(key, 3)

    N, Cin, H, W = 2, 4, 16, 16
    Cout, K = 3, 3

    x = jax.random.normal(k_x, (N, Cin, H, W), dtype=jnp.float32)
    fan_in = Cin * K * K
    weight = jax.random.normal(k_w, (Cout, Cin, K, K), dtype=jnp.float32) / jnp.sqrt(fan_in)
    bias = jax.random.normal(k_b, (Cout,), dtype=jnp.float32) * 0.1

    out = to_image(x, weight, bias)
    out = jax.block_until_ready(out)

    ref = _reference(x, weight, bias)
    assert out.shape == (N, Cout, H, W), out.shape
    assert jnp.allclose(out, ref, atol=1e-4, rtol=1e-4), float(jnp.max(jnp.abs(out - ref)))

    print("KERNEL_OK")
</pallas_src>

<mosaic_0001>
module attributes {stable_mosaic.version = 11 : i64} {
  func.func @_to_image_kernel(%arg0: i32, %arg1: memref<1x4x256xf32, #tpu.memory_space<vmem>>, %arg2: memref<3x36xf32, #tpu.memory_space<vmem>>, %arg3: memref<3x1xf32, #tpu.memory_space<vmem>>, %arg4: memref<1x3x256xf32, #tpu.memory_space<vmem>>, %arg5: memref<4x290xf32, #tpu.memory_space<vmem>>, %arg6: memref<36x256xf32, #tpu.memory_space<vmem>>) attributes {dimension_semantics = [#tpu.dimension_semantics<parallel>], iteration_bounds = array<i64: 2>, scalar_prefetch = 0 : i64, scratch_operands = 2 : i64, tpu.core_type = #tpu.core_type<tc>, window_params = [{transform_indices = @transform_0, window_bounds = array<i64: 1, 4, 256>}, {pipeline_mode = #tpu.pipeline_mode<synchronous>, transform_indices = @transform_1, window_bounds = array<i64: 3, 36>}, {pipeline_mode = #tpu.pipeline_mode<synchronous>, transform_indices = @transform_2, window_bounds = array<i64: 3, 1>}, {transform_indices = @transform_3, window_bounds = array<i64: 1, 3, 256>}]} {
    %cst = arith.constant 0.000000e+00 : f32
    %0 = vector.broadcast %cst : f32 to vector<4x17xf32>
    %c0 = arith.constant 0 : index
    %c0_0 = arith.constant 0 : index
    %1 = vector.load %arg5[%c0, %c0_0] : memref<4x290xf32, #tpu.memory_space<vmem>>, vector<4x17xf32>
    tpu.vector_store %arg5[%c0, %c0_0], %0 {strides = array<i32>} : memref<4x290xf32, #tpu.memory_space<vmem>>, vector<4x17xf32>,
    %cst_1 = arith.constant 0.000000e+00 : f32
    %2 = vector.broadcast %cst_1 : f32 to vector<4x17xf32>
    %c0_2 = arith.constant 0 : index
    %c273 = arith.constant 273 : index
    %3 = vector.load %arg5[%c0_2, %c273] : memref<4x290xf32, #tpu.memory_space<vmem>>, vector<4x17xf32>
    tpu.vector_store %arg5[%c0_2, %c273], %2 {strides = array<i32>} : memref<4x290xf32, #tpu.memory_space<vmem>>, vector<4x17xf32>,
    %c0_3 = arith.constant 0 : index
    %c0_4 = arith.constant 0 : index
    %c0_5 = arith.constant 0 : index
    %4 = vector.load %arg1[%c0_3, %c0_4, %c0_5] : memref<1x4x256xf32, #tpu.memory_space<vmem>>, vector<1x4x256xf32>
    %5 = vector.shape_cast %4 : vector<1x4x256xf32> to vector<4x256xf32>
    %c0_6 = arith.constant 0 : index
    %c17 = arith.constant 17 : index
    %6 = vector.load %arg5[%c0_6, %c17] : memref<4x290xf32, #tpu.memory_space<vmem>>, vector<4x256xf32>
    tpu.vector_store %arg5[%c0_6, %c17], %5 {strides = array<i32>} : memref<4x290xf32, #tpu.memory_space<vmem>>, vector<4x256xf32>,
    %7 = tpu.iota {dimensions = array<i32: 1>} : vector<4x256xi32>
    %c16_i32 = arith.constant 16 : i32
    %c0_i32 = arith.constant 0 : i32
    %8 = arith.cmpi eq, %c16_i32, %c0_i32 : i32
    %c1_i32 = arith.constant 1 : i32
    %9 = arith.select %8, %c1_i32, %c16_i32 : i32
    %10 = vector.broadcast %9 : i32 to vector<4x256xi32>
    %11 = arith.remsi %7, %10 : vector<4x256xi32>
    %c0_i32_7 = arith.constant 0 : i32
    %12 = vector.broadcast %c0_i32_7 : i32 to vector<4x256xi32>
    %13 = arith.cmpi ne, %11, %12 : vector<4x256xi32>
    %c0_i32_8 = arith.constant 0 : i32
    %14 = vector.broadcast %c0_i32_8 : i32 to vector<4x256xi32>
    %15 = arith.cmpi slt, %11, %14 : vector<4x256xi32>
    %c0_i32_9 = arith.constant 0 : i32
    %16 = arith.cmpi slt, %9, %c0_i32_9 : i32
    %17 = vector.broadcast %16 : i1 to vector<4x256xi1>
    %18 = vector.broadcast %17 : vector<4x256xi1> to vector<4x256xi1>
    %19 = arith.xori %15, %18 : vector<4x256xi1>
    %20 = arith.andi %19, %13 : vector<4x256xi1>
    %21 = vector.broadcast %9 : i32 to vector<4x256xi32>
    %22 = arith.addi %11, %21 : vector<4x256xi32>
    %23 = arith.select %20, %22, %11 : vector<4x256xi1>, vector<4x256xi32>
    %c0_10 = arith.constant 0 : index
    %c0_11 = arith.constant 0 : index
    %24 = vector.load %arg5[%c0_10, %c0_11] : memref<4x290xf32, #tpu.memory_space<vmem>>, vector<4x256xf32>
    %c1_i32_12 = arith.constant 1 : i32
    %25 = vector.broadcast %c1_i32_12 : i32 to vector<4x256xi32>
    %26 = arith.cmpi sge, %23, %25 : vector<4x256xi32>
    %cst_13 = arith.constant 0.000000e+00 : f32
    %27 = vector.broadcast %cst_13 : f32 to vector<4x256xf32>
    %28 = arith.select %26, %24, %27 : vector<4x256xi1>, vector<4x256xf32>
    %c0_14 = arith.constant 0 : index
    %c0_15 = arith.constant 0 : index
    %29 = vector.load %arg6[%c0_14, %c0_15] : memref<36x256xf32, #tpu.memory_space<vmem>>, vector<4x256xf32>
    tpu.vector_store %arg6[%c0_14, %c0_15], %28 {strides = array<i32>} : memref<36x256xf32, #tpu.memory_space<vmem>>, vector<4x256xf32>,
    %c0_16 = arith.constant 0 : index
    %c1 = arith.constant 1 : index
    %30 = vector.load %arg5[%c0_16, %c1] : memref<4x290xf32, #tpu.memory_space<vmem>>, vector<4x256xf32>
    %c4 = arith.constant 4 : index
    %c0_17 = arith.constant 0 : index
    %31 = vector.load %arg6[%c4, %c0_17] : memref<36x256xf32, #tpu.memory_space<vmem>>, vector<4x256xf32>
    tpu.vector_store %arg6[%c4, %c0_17], %30 {strides = array<i32>} : memref<36x256xf32, #tpu.memory_space<vmem>>, vector<4x256xf32>,
    %c0_18 = arith.constant 0 : index
    %c2 = arith.constant 2 : index
    %32 = vector.load %arg5[%c0_18, %c2] : memref<4x290xf32, #tpu.memory_space<vmem>>, vector<4x256xf32>
    %c14_i32 = arith.constant 14 : i32
    %33 = vector.broadcast %c14_i32 : i32 to vector<4x256xi32>
    %34 = arith.cmpi sle, %23, %33 : vector<4x256xi32>
    %cst_19 = arith.constant 0.000000e+00 : f32
    %35 = vector.broadcast %cst_19 : f32 to vector<4x256xf32>
    %36 = arith.select %34, %32, %35 : vector<4x256xi1>, vector<4x256xf32>
    %c8 = arith.constant 8 : index
    %c0_20 = arith.constant 0 : index
    %37 = vector.load %arg6[%c8, %c0_20] : memref<36x256xf32, #tpu.memory_space<vmem>>, vector<4x256xf32>
    tpu.vector_store %arg6[%c8, %c0_20], %36 {strides = array<i32>} : memref<36x256xf32, #tpu.memory_space<vmem>>, vector<4x256xf32>,
    %c0_21 = arith.constant 0 : index
    %c16 = arith.constant 16 : index
    %38 = vector.load %arg5[%c0_21, %c16] : memref<4x290xf32, #tpu.memory_space<vmem>>, vector<4x256xf32>
    %c1_i32_22 = arith.constant 1 : i32
    %39 = vector.broadcast %c1_i32_22 : i32 to vector<4x256xi32>
    %40 = arith.cmpi sge, %23, %39 : vector<4x256xi32>
    %cst_23 = arith.constant 0.000000e+00 : f32
    %41 = vector.broadcast %cst_23 : f32 to vector<4x256xf32>
    %42 = arith.select %40, %38, %41 : vector<4x256xi1>, vector<4x256xf32>
    %c12 = arith.constant 12 : index
    %c0_24 = arith.constant 0 : index
    %43 = vector.load %arg6[%c12, %c0_24] : memref<36x256xf32, #tpu.memory_space<vmem>>, vector<4x256xf32>
    tpu.vector_store %arg6[%c12, %c0_24], %42 {strides = array<i32>} : memref<36x256xf32, #tpu.memory_space<vmem>>, vector<4x256xf32>,
    %c0_25 = arith.constant 0 : index
    %c17_26 = arith.constant 17 : index
    %44 = vector.load %arg5[%c0_25, %c17_26] : memref<4x290xf32, #tpu.memory_space<vmem>>, vector<4x256xf32>
    %c16_27 = arith.constant 16 : index
    %c0_28 = arith.constant 0 : index
    %45 = vector.load %arg6[%c16_27, %c0_28] : memref<36x256xf32, #tpu.memory_space<vmem>>, vector<4x256xf32>
    tpu.vector_store %arg6[%c16_27, %c0_28], %44 {strides = array<i32>} : memref<36x256xf32, #tpu.memory_space<vmem>>, vector<4x256xf32>,
    %c0_29 = arith.constant 0 : index
    %c18 = arith.constant 18 : index
    %46 = vector.load %arg5[%c0_29, %c18] : memref<4x290xf32, #tpu.memory_space<vmem>>, vector<4x256xf32>
    %c14_i32_30 = arith.constant 14 : i32
    %47 = vector.broadcast %c14_i32_30 : i32 to vector<4x256xi32>
    %48 = arith.cmpi sle, %23, %47 : vector<4x256xi32>
    %cst_31 = arith.constant 0.000000e+00 : f32
    %49 = vector.broadcast %cst_31 : f32 to vector<4x256xf32>
    %50 = arith.select %48, %46, %49 : vector<4x256xi1>, vector<4x256xf32>
    %c20 = arith.constant 20 : index
    %c0_32 = arith.constant 0 : index
    %51 = vector.load %arg6[%c20, %c0_32] : memref<36x256xf32, #tpu.memory_space<vmem>>, vector<4x256xf32>
    tpu.vector_store %arg6[%c20, %c0_32], %50 {strides = array<i32>} : memref<36x256xf32, #tpu.memory_space<vmem>>, vector<4x256xf32>,
    %c0_33 = arith.constant 0 : index
    %c32 = arith.constant 32 : index
    %52 = vector.load %arg5[%c0_33, %c32] : memref<4x290xf32, #tpu.memory_space<vmem>>, vector<4x256xf32>
    %c1_i32_34 = arith.constant 1 : i32
    %53 = vector.broadcast %c1_i32_34 : i32 to vector<4x256xi32>
    %54 = arith.cmpi sge, %23, %53 : vector<4x256xi32>
    %cst_35 = arith.constant 0.000000e+00 : f32
    %55 = vector.broadcast %cst_35 : f32 to vector<4x256xf32>
    %56 = arith.select %54, %52, %55 : vector<4x256xi1>, vector<4x256xf32>
    %c24 = arith.constant 24 : index
    %c0_36 = arith.constant 0 : index
    %57 = vector.load %arg6[%c24, %c0_36] : memref<36x256xf32, #tpu.memory_space<vmem>>, vector<4x256xf32>
    tpu.vector_store %arg6[%c24, %c0_36], %56 {strides = array<i32>} : memref<36x256xf32, #tpu.memory_space<vmem>>, vector<4x256xf32>,
    %c0_37 = arith.constant 0 : index
    %c33 = arith.constant 33 : index
    %58 = vector.load %arg5[%c0_37, %c33] : memref<4x290xf32, #tpu.memory_space<vmem>>, vector<4x256xf32>
    %c28 = arith.constant 28 : index
    %c0_38 = arith.constant 0 : index
    %59 = vector.load %arg6[%c28, %c0_38] : memref<36x256xf32, #tpu.memory_space<vmem>>, vector<4x256xf32>
    tpu.vector_store %arg6[%c28, %c0_38], %58 {strides = array<i32>} : memref<36x256xf32, #tpu.memory_space<vmem>>, vector<4x256xf32>,
    %c0_39 = arith.constant 0 : index
    %c34 = arith.constant 34 : index
    %60 = vector.load %arg5[%c0_39, %c34] : memref<4x290xf32, #tpu.memory_space<vmem>>, vector<4x256xf32>
    %c14_i32_40 = arith.constant 14 : i32
    %61 = vector.broadcast %c14_i32_40 : i32 to vector<4x256xi32>
    %62 = arith.cmpi sle, %23, %61 : vector<4x256xi32>
    %cst_41 = arith.constant 0.000000e+00 : f32
    %63 = vector.broadcast %cst_41 : f32 to vector<4x256xf32>
    %64 = arith.select %62, %60, %63 : vector<4x256xi1>, vector<4x256xf32>
    %c32_42 = arith.constant 32 : index
    %c0_43 = arith.constant 0 : index
    %65 = vector.load %arg6[%c32_42, %c0_43] : memref<36x256xf32, #tpu.memory_space<vmem>>, vector<4x256xf32>
    tpu.vector_store %arg6[%c32_42, %c0_43], %64 {strides = array<i32>} : memref<36x256xf32, #tpu.memory_space<vmem>>, vector<4x256xf32>,
    %c0_44 = arith.constant 0 : index
    %c0_45 = arith.constant 0 : index
    %66 = vector.load %arg2[%c0_44, %c0_45] : memref<3x36xf32, #tpu.memory_space<vmem>>, vector<3x36xf32>
    %c0_46 = arith.constant 0 : index
    %c0_47 = arith.constant 0 : index
    %67 = vector.load %arg6[%c0_46, %c0_47] : memref<36x256xf32, #tpu.memory_space<vmem>>, vector<36x256xf32>
    %cst_48 = arith.constant dense<0.000000e+00> : vector<3x256xf32>
    %68 = tpu.matmul %66, %67, %cst_48 {dimension_numbers = #tpu.dot_dimension_numbers<[1], [0], [0], [1], [0, 0, 1, 1], [], []>} : vector<3x36xf32>, vector<36x256xf32>, vector<3x256xf32> -> vector<3x256xf32>
    %c0_49 = arith.constant 0 : index
    %c0_50 = arith.constant 0 : index
    %69 = vector.load %arg3[%c0_49, %c0_50] : memref<3x1xf32, #tpu.memory_space<vmem>>, vector<3x1xf32>
    %70 = vector.broadcast %69 : vector<3x1xf32> to vector<3x256xf32>
    %71 = arith.addf %68, %70 : vector<3x256xf32>
    %cst_51 = arith.constant 0.000000e+00 : f32
    %72 = vector.broadcast %cst_51 : f32 to vector<3x256xf32>
    %73 = arith.cmpf oge, %71, %72 : vector<3x256xf32>
    %cst_52 = arith.constant 2.000000e-01 : f32
    %74 = vector.broadcast %cst_52 : f32 to vector<3x256xf32>
    %75 = arith.mulf %74, %71 : vector<3x256xf32>
    %76 = arith.select %73, %71, %75 : vector<3x256xi1>, vector<3x256xf32>
    %c0_53 = arith.constant 0 : index
    %c0_54 = arith.constant 0 : index
    %c0_55 = arith.constant 0 : index
    %77 = vector.load %arg4[%c0_53, %c0_54, %c0_55] : memref<1x3x256xf32, #tpu.memory_space<vmem>>, vector<1x3x256xf32>
    %78 = vector.shape_cast %77 : vector<1x3x256xf32> to vector<3x256xf32>
    %79 = vector.shape_cast %76 : vector<3x256xf32> to vector<1x3x256xf32>
    tpu.vector_store %arg4[%c0_53, %c0_54, %c0_55], %79 {strides = array<i32>} : memref<1x3x256xf32, #tpu.memory_space<vmem>>, vector<1x3x256xf32>,
    return
  }
  func.func @transform_0(%arg0: i32) -> (i32, i32, i32) {
    %c0_i32 = arith.constant 0 : i32
    %c0_i32_0 = arith.constant 0 : i32
    %c0_i32_1 = arith.constant 0 : i32
    return %arg0, %c0_i32, %c0_i32_0 : i32, i32, i32
  }
  func.func @transform_1(%arg0: i32) -> (i32, i32) {
    %c0_i32 = arith.constant 0 : i32
    %c0_i32_0 = arith.constant 0 : i32
    %c0_i32_1 = arith.constant 0 : i32
    return %c0_i32, %c0_i32_0 : i32, i32
  }
  func.func @transform_2(%arg0: i32) -> (i32, i32) {
    %c0_i32 = arith.constant 0 : i32
    %c0_i32_0 = arith.constant 0 : i32
    %c0_i32_1 = arith.constant 0 : i32
    return %c0_i32, %c0_i32_0 : i32, i32
  }
  func.func @transform_3(%arg0: i32) -> (i32, i32, i32) {
    %c0_i32 = arith.constant 0 : i32
    %c0_i32_0 = arith.constant 0 : i32
    %c0_i32_1 = arith.constant 0 : i32
    return %arg0, %c0_i32, %c0_i32_0 : i32, i32, i32
  }
}

</mosaic_0001>

<llo_original>
// kernel: tpu_custom_call.1
$region0: #{tpu_custom_call.1}
  #allocation0 [shape = 'u32[]', space=smem, size = 0x4, offset = 0x4, fixed_abs, tag = 'smem constant byte address 0x4 - core index']
  #allocation1 [shape = 'u32[144,128]{1,0:T(1,128)}', space=vmem, size = 0x12000, scoped, tag = 'internal scratch']
  #allocation2 [shape = 'f32[4,290]{1,0:T(4,128)}', space=vmem, size = 0x1800, scoped, tag = 'scratch operand']
  #allocation3 [shape = 'f32[36,256]{1,0:T(8,128)}', space=vmem, size = 0xa000, scoped, tag = 'scratch operand']
  %s0 = inlined_call_operand.hbm [shape: f32[2,4,256], index: 0, kind: input, shape index: {}]
  %s1 = inlined_call_operand.vmem [shape: f32[3,36], index: 1, kind: input, shape index: {}]
  %s2 = inlined_call_operand.vmem [shape: f32[3,1], index: 2, kind: input, shape index: {}]
  %s3 = inlined_call_operand.vmem [shape: f32[2,3,256], index: 3, kind: output, shape index: {}]
  %s4 = sld [smem:[#allocation0]]
  $region49: #{tpu_custom_call.1} parent=0
    _
  %s6 = ssub.s32 1, %s4
  %s7 = scalar_select 0, %s6, %s4
  $region1: #{tpu_custom_call.1} parent=0
    #allocation4 [shape = 'u8[8192]{0}', space=vmem, size = 0x2000, scoped, tag = 'input window, operand 0']
    #allocation5 [shape = 's32[2]{0}', space=sflag, size = 0x8, scoped, tag = 'scoped memory for tpu_custom_call.1']
    %8 = vsyncpa [#allocation5], 0
    %s9 = scalar_lea.sflag [#allocation5], 1
    %10 = vsyncpa %s9, 0
    loop: start=0, step=1, limit=4
    $region2: #{tpu_custom_call.1} parent=1 // loop_pre_header
      _
    $region3: #{tpu_custom_call.1} parent=1 // loop_header
      %s12 = sphi 0, %s16
      %p13 = scmp.ge.s32.totalorder %s12, 4
      %s22 = sphi 0, %s24
      %s25 = sphi 0, %s22
      %s26 = sphi 0, %s25
      %s42 = sphi 0, %s26
      %s46 = sphi 0, %s46
      %s48 = sphi 0, %s46
      %s49 = sphi 0, %s48
      %s63 = sphi 0, %s49
      %s67 = sphi 0, %s67
      %s69 = sphi 0, %s67
      %s70 = sphi 0, %s69
      %s84 = sphi 0, %s70
      %s90 = sphi 0, %s92
      %s93 = sphi 0, %s90
      %s94 = sphi 0, %s93
      %s110 = sphi 0, %s94
    $region4: #{tpu_custom_call.1} parent=1 // loop_header_branch
      %15 = sbr.rel (%p13) target = $region8
    $region5: #{tpu_custom_call.1} parent=1 // loop_body
      %s17 = ssub.s32 %s12, 1
      %s18 = ssub.s32 %s12, 2
      %s19 = sadd.s32 %s12, 1
      %s20 = ssub.s32 %s12, %s19
      %p21 = scmp.eq.s32.totalorder %s20, 0
      %s23 = sadd.s32 %s22, 1
      %s24 = scalar_select %p21, %s22, %s23
      %p27 = pneg %p21
      %p28 = scmp.eq.s32.totalorder %s12, 1
      %p29 = por %p27, %p28
      %p30 = scmp.ne.s32.totalorder %s22, %s25
      %p31 = scmp.eq.s32.totalorder %s12, 0
      %p32 = por %p30, %p31
      %p33 = scmp.ne.s32.totalorder %s22, %s25
      %p34 = scmp.eq.s32.totalorder %s17, 1
      %p35 = por %p33, %p34
      %p36 = scmp.ne.s32.totalorder %s25, %s26
      %p37 = scmp.eq.s32.totalorder %s17, 0
      %p38 = por %p36, %p37
      %p39 = scmp.ne.s32.totalorder %s25, %s26
      %p40 = scmp.eq.s32.totalorder %s18, 1
      %p41 = por %p39, %p40
      %p43 = scmp.ne.s32.totalorder %s26, %s42
      %p44 = scmp.eq.s32.totalorder %s18, 0
      %p45 = por %p43, %p44
      %s47 = sadd.s32 %s46, 1
      %p50 = scmp.eq.s32.totalorder %s12, 1
      %p51 = scmp.ne.s32.totalorder %s46, %s48
      %p52 = scmp.eq.s32.totalorder %s12, 0
      %p53 = por %p51, %p52
      %p54 = scmp.ne.s32.totalorder %s46, %s48
      %p55 = scmp.eq.s32.totalorder %s17, 1
      %p56 = por %p54, %p55
      %p57 = scmp.ne.s32.totalorder %s48, %s49
      %p58 = scmp.eq.s32.totalorder %s17, 0
      %p59 = por %p57, %p58
      %p60 = scmp.ne.s32.totalorder %s48, %s49
      %p61 = scmp.eq.s32.totalorder %s18, 1
      %p62 = por %p60, %p61
      %p64 = scmp.ne.s32.totalorder %s49, %s63
      %p65 = scmp.eq.s32.totalorder %s18, 0
      %p66 = por %p64, %p65
      %s68 = sadd.s32 %s67, 1
      %p71 = scmp.eq.s32.totalorder %s12, 1
      %p72 = scmp.ne.s32.totalorder %s67, %s69
      %p73 = scmp.eq.s32.totalorder %s12, 0
      %p74 = por %p72, %p73
      %p75 = scmp.ne.s32.totalorder %s67, %s69
      %p76 = scmp.eq.s32.totalorder %s17, 1
      %p77 = por %p75, %p76
      %p78 = scmp.ne.s32.totalorder %s69, %s70
      %p79 = scmp.eq.s32.totalorder %s17, 0
      %p80 = por %p78, %p79
      %p81 = scmp.ne.s32.totalorder %s69, %s70
      %p82 = scmp.eq.s32.totalorder %s18, 1
      %p83 = por %p81, %p82
      %p85 = scmp.ne.s32.totalorder %s70, %s84
      %p86 = scmp.eq.s32.totalorder %s18, 0
      %p87 = por %p85, %p86
      %s88 = ssub.s32 %s12, %s19
      %p89 = scmp.eq.s32.totalorder %s88, 0
      %s91 = sadd.s32 %s90, 1
      %s92 = scalar_select %p89, %s90, %s91
      %p95 = pneg %p89
      %p96 = scmp.eq.s32.totalorder %s12, 1
      %p97 = por %p95, %p96
      %p98 = scmp.ne.s32.totalorder %s90, %s93
      %p99 = scmp.eq.s32.totalorder %s12, 0
      %p100 = por %p98, %p99
      %p101 = scmp.ne.s32.totalorder %s90, %s93
      %p102 = scmp.eq.s32.totalorder %s17, 1
      %p103 = por %p101, %p102
      %p104 = scmp.ne.s32.totalorder %s93, %s94
      %p105 = scmp.eq.s32.totalorder %s17, 0
      %p106 = por %p104, %p105
      %p107 = scmp.ne.s32.totalorder %s93, %s94
      %p108 = scmp.eq.s32.totalorder %s18, 1
      %p109 = por %p107, %p108
      %p111 = scmp.ne.s32.totalorder %s94, %s110
      %p112 = scmp.eq.s32.totalorder %s18, 0
      %p113 = por %p111, %p112
      %p114 = scmp.le.s32.totalorder 1, %s12
      %p115 = scmp.lt.s32.totalorder %s12, 3
      %p116 = pnand %p114, %p115
      %p117 = pneg %p116
      // Predicated region
      $region9: #{tpu_custom_call.1} parent=5 // pred_check
        _
      $region10: #{tpu_custom_call.1} parent=5 // pred_check_branch
        %119 = sbr.rel (%p116) target = $region12
      $region11: #{tpu_custom_call.1} parent=5 // pred_region
        %s120 = ssub.s32 %s12, 1
        // Predicated region
        $region13: #{tpu_custom_call.1} parent=11 // pred_check
          %p121 = pneg %p59
        $region14: #{tpu_custom_call.1} parent=11 // pred_check_branch
          %123 = sbr.rel (%p121) target = $region16
        $region15: #{tpu_custom_call.1} parent=11 // pred_region
          _
        $region16: #{tpu_custom_call.1} parent=11 // pred_fallthru
          _
        // Predicated region
        $region17: #{tpu_custom_call.1} parent=11 // pred_check
          %p124 = pneg %p80
        $region18: #{tpu_custom_call.1} parent=11 // pred_check_branch
          %126 = sbr.rel (%p124) target = $region20
        $region19: #{tpu_custom_call.1} parent=11 // pred_region
          _
        $region20: #{tpu_custom_call.1} parent=11 // pred_fallthru
          _
      $region12: #{tpu_custom_call.1} parent=5 // pred_fallthru
        _
      %p127 = scmp.lt.s32.totalorder %s12, 2
      // Predicated region
      $region21: #{tpu_custom_call.1} parent=5 // pred_check
        %p128 = pneg %p127
      $region22: #{tpu_custom_call.1} parent=5 // pred_check_branch
        %130 = sbr.rel (%p128) target = $region24
      $region23: #{tpu_custom_call.1} parent=5 // pred_region
        // Predicated region
        $region25: #{tpu_custom_call.1} parent=23 // pred_check
          %p131 = pneg %p32
        $region26: #{tpu_custom_call.1} parent=23 // pred_check_branch
          %133 = sbr.rel (%p131) target = $region28
        $region27: #{tpu_custom_call.1} parent=23 // pred_region
          %s134 = sand.u32 %s22, 1
          %s135 = scalar_lea.sflag [#allocation5], %s134
          %s136 = sand.u32 %s22, 1
          %s137 = smul.addr %s136, 8
          %s138 = scalar_lea.vmem [#allocation4], %s137
          %s140 = ssub.s32 128, 128
          %141 = vsyncadd %s135, %s140
          %s142 = smul.addr %s12, 2
          %s143 = smul.addr %s142, 64
          %s144 = scalar_lea.hbm %s0, %s143
          %s146 = sshll.u32 %s138, 4
          %s147 = int_to_ptr.vmem [resolvable:$true] %s146
          %149 = dma.hbm_to_vmem [thread:$0]  %s144, 128, %s147, %s135
        $region28: #{tpu_custom_call.1} parent=23 // pred_fallthru
          _
      $region24: #{tpu_custom_call.1} parent=5 // pred_fallthru
        _
      %p150 = scmp.le.s32.totalorder 1, %s12
      %p151 = scmp.lt.s32.totalorder %s12, 3
      %p152 = pnand %p150, %p151
      %p153 = pneg %p152
      // Predicated region
      $region29: #{tpu_custom_call.1} parent=5 // pred_check
        _
      $region30: #{tpu_custom_call.1} parent=5 // pred_check_branch
        %155 = sbr.rel (%p152) target = $region32
      $region31: #{tpu_custom_call.1} parent=5 // pred_region
        %s156 = ssub.s32 %s12, 1
        %s157 = sand.u32 %s25, 1
        %s158 = scalar_lea.sflag [#allocation5], %s157
        %s159 = sand.u32 %s25, 1
        %s160 = smul.addr %s159, 8
        %s161 = scalar_lea.vmem [#allocation4], %s160
        // Predicated region
        $region33: #{tpu_custom_call.1} parent=31 // pred_check
          %p162 = pneg %p38
        $region34: #{tpu_custom_call.1} parent=31 // pred_check_branch
          %164 = sbr.rel (%p162) target = $region36
        $region35: #{tpu_custom_call.1} parent=31 // pred_region
          %165 = dma.done %s158, 128
        $region36: #{tpu_custom_call.1} parent=31 // pred_fallthru
          _
        %s166 = sand.u32 %s25, 1
        %s167 = scalar_lea.sflag [#allocation5], %s166
        %s168 = sand.u32 %s25, 1
        %s169 = smul.addr %s168, 8
        %s170 = scalar_lea.vmem [#allocation4], %s169
        %p171 = pneg %p38
        %p172 = pneg %p35
        %p173 = pneg %p59
        %p174 = pneg %p56
        %p175 = pneg %p80
        %p176 = pneg %p77
        %p177 = pneg %p106
        %p178 = pneg %p103
        %p179 = scmp.lt.s32.totalorder %s17, 1
        %s180 = scalar_select %p179, %s17, 1
        %s181 = smul.addr %s180, 2
        %s182 = smul.addr %s181, 4
        %s183 = scalar_lea.vmem %s3, %s182
        %p184 = scmp.lt.s32.totalorder %s17, 1
        %s185 = scalar_select %p184, %s17, 1
        %s186 = smul.addr %s185, 2
        %s187 = smul.addr %s186, 4
        %s188 = scalar_lea.vmem %s3, %s187
        %vm189 = vcmask 134144
        %190 = vst.msk [vmem:[#allocation2] sm:$0xf] %vm189, 0.0
        %vm191 = vcmask 273544
        %192 = vst.msk [vmem:[#allocation2 + $0x8] sm:$0xf] %vm191, 0.0
        %v193 = vld [vmem:[%s161] sm:$0xff]
        %195 = vrot.lane.b32.xlu0 %v193, 17
        %v196 = vpop.permute.xlu0 %195
        %v197 = vrot.slane %v196, 4
        %vm198 = vcmask 138240
        %v199 = vsel %vm198, %v197, %v196
        %vm202 = vcmask 1043592
        %vm203 = vcmask 1047556
        %vm204 = vmor %vm203, %vm202
        %205 = vst.msk [vmem:[#allocation2] sm:$0xff] %vm204, %v199
        %206 = vst.msk [vmem:[#allocation2 + $0x8] sm:$0xf] %vm189, %v197
        %v207 = vlaneseq
        %v208 = vand.u32 %v207, 127
        %v209 = vadd.s32 %v208, 128
        %vm210 = vcmp.lt.s32.totalorder %v208, 0
        %v211 = vsub.s32 0, %v208
        %v212 = vsel %vm210, %v211, %v208
        %v213 = vshrl.u32 %v212, 4
        %v214 = vand.u32 %v212, 15
        %v215 = vsub.s32 0, %v214
        %v216 = vsel %vm210, %v215, %v214
        %vm217 = vcmp.lt.s32.totalorder %v209, 0
        %v218 = vsub.s32 0, %v209
        %v219 = vsel %vm217, %v218, %v209
        %v220 = vshrl.u32 %v219, 4
        %v221 = vand.u32 %v219, 15
        %v222 = vsub.s32 0, %v221
        %v223 = vsel %vm217, %v222, %v221
        %vm224 = vcmp.ne.s32.totalorder %v216, 0
        %vm225 = vcmp.ne.s32.totalorder %v223, 0
        %vm226 = vcmp.lt.s32.totalorder %v216, 0
        %vm227 = vcmp.lt.s32.totalorder %v223, 0
        %vm228 = vmand %vm226, %vm224
        %vm229 = vmand %vm227, %vm225
        %v230 = vadd.s32 %v216, 16
        %v231 = vadd.s32 %v223, 16
        %v232 = vsel %vm228, %v230, %v216
        %v233 = vsel %vm229, %v231, %v223
        %v234 = vld [vmem:[#allocation2] sm:$0xff]
        %vm235 = vcmp.ge.s32.totalorder %v232, 1
        %vm236 = vcmp.ge.s32.totalorder %v233, 1
        %v238 = vcombine.high %v234, %v234
        %v240 = vsel %vm235, %v234, 0.0
        %v241 = vsel %vm236, %v238, 0.0
        %242 = vst [vmem:[#allocation3] sm:$0xf] %v240
        %243 = vst [vmem:[#allocation3 + $0x8] sm:$0xf] %v241
        %v244 = vld [vmem:[#allocation2] sm:$0xff]
        %v245 = vld [vmem:[#allocation2 + $0x8] sm:$0xf]
        %v248 = vcombine.low %v244, %v244
        %v249 = vcombine.low %v245, %v245
        %250 = vrot.lane.b32.xlu0 %v248, 127
        %v251 = vpop.permute.xlu0 %250
        %252 = vrot.lane.b32.xlu0 %v244, 127
        %v253 = vpop.permute.xlu0 %252
        %254 = vrot.lane.b32.xlu0 %v249, 127
        %v255 = vpop.permute.xlu0 %254
        %vm256 = vcmask 1039360
        %v257 = vsel %vm256, %v251, %v253
        %v258 = vsel %vm256, %v253, %v255
        %261 = vst [vmem:[#allocation3] sm:$0xf0] %v257
        %262 = vst [vmem:[#allocation3 + $0x8] sm:$0xf0] %v258
        %v263 = vld [vmem:[#allocation2] sm:$0xff]
        %v264 = vld [vmem:[#allocation2 + $0x8] sm:$0xf]
        %vm265 = vcmp.le.s32.totalorder %v232, 14
        %vm266 = vcmp.le.s32.totalorder %v233, 14
        %v269 = vcombine.high %v263, %v263
        %270 = vrot.lane.b32.xlu0 %v263, 126
        %v271 = vpop.permute.xlu0 %270
        %272 = vrot.lane.b32.xlu0 %v269, 126
        %v273 = vpop.permute.xlu0 %272
        %274 = vrot.lane.b32.xlu0 %v264, 126
        %v275 = vpop.permute.xlu0 %274
        %vm276 = vcmask 1031168
        %v277 = vsel %vm276, %v271, %v273
        %v278 = vsel %vm276, %v273, %v275
        %v281 = vsel %vm265, %v277, 0.0
        %v282 = vsel %vm266, %v278, 0.0
        %283 = vst [vmem:[#allocation3 + $0x10] sm:$0xf] %v281
        %284 = vst [vmem:[#allocation3 + $0x18] sm:$0xf] %v282
        %v285 = vld [vmem:[#allocation2] sm:$0xff]
        %v286 = vld [vmem:[#allocation2 + $0x8] sm:$0xf]
        %v289 = vcombine.high %v285, %v285
        %290 = vrot.lane.b32.xlu0 %v285, 112
        %v291 = vpop.permute.xlu0 %290
        %292 = vrot.lane.b32.xlu0 %v289, 112
        %v293 = vpop.permute.xlu0 %292
        %294 = vrot.lane.b32.xlu0 %v286, 112
        %v295 = vpop.permute.xlu0 %294
        %vm296 = vcmask 916480
        %v297 = vsel %vm296, %v291, %v293
        %v298 = vsel %vm296, %v293, %v295
        %v301 = vsel %vm235, %v297, 0.0
        %v302 = vsel %vm236, %v298, 0.0
        %v305 = vrot.slane %v301, 4
        %v306 = vrot.slane %v302, 4
        %309 = vst [vmem:[#allocation3 + $0x10] sm:$0xf0] %v305
        %310 = vst [vmem:[#allocation3 + $0x18] sm:$0xf0] %v306
        %v311 = vld [vmem:[#allocation2] sm:$0xff]
        %v312 = vld [vmem:[#allocation2 + $0x8] sm:$0xf]
        %v315 = vcombine.high %v311, %v311
        %316 = vrot.lane.b32.xlu0 %v311, 111
        %v317 = vpop.permute.xlu0 %316
        %318 = vrot.lane.b32.xlu0 %v315, 111
        %v319 = vpop.permute.xlu0 %318
        %320 = vrot.lane.b32.xlu0 %v312, 111
        %v321 = vpop.permute.xlu0 %320
        %vm322 = vcmask 908288
        %v323 = vsel %vm322, %v317, %v319
        %v324 = vsel %vm322, %v319, %v321
        %327 = vst [vmem:[#allocation3 + $0x20] sm:$0xf] %v323
        %328 = vst [vmem:[#allocation3 + $0x28] sm:$0xf] %v324
        %v329 = vld [vmem:[#allocation2] sm:$0xff]
        %v330 = vld [vmem:[#allocation2 + $0x8] sm:$0xf]
        %v333 = vcombine.high %v329, %v329
        %334 = vrot.lane.b32.xlu0 %v329, 110
        %v335 = vpop.permute.xlu0 %334
        %336 = vrot.lane.b32.xlu0 %v333, 110
        %v337 = vpop.permute.xlu0 %336
        %338 = vrot.lane.b32.xlu0 %v330, 110
        %v339 = vpop.permute.xlu0 %338
        %vm340 = vcmask 900096
        %v341 = vsel %vm340, %v335, %v337
        %v342 = vsel %vm340, %v337, %v339
        %v345 = vsel %vm265, %v341, 0.0
        %v346 = vsel %vm266, %v342, 0.0
        %v349 = vrot.slane %v345, 4
        %v350 = vrot.slane %v346, 4
        %353 = vst [vmem:[#allocation3 + $0x20] sm:$0xf0] %v349
        %354 = vst [vmem:[#allocation3 + $0x28] sm:$0xf0] %v350
        %v355 = vld [vmem:[#allocation2] sm:$0xff]
        %v356 = vld [vmem:[#allocation2 + $0x8] sm:$0xf]
        %v359 = vcombine.high %v355, %v355
        %360 = vrot.lane.b32.xlu0 %v355, 96
        %v361 = vpop.permute.xlu0 %360
        %362 = vrot.lane.b32.xlu0 %v359, 96
        %v363 = vpop.permute.xlu0 %362
        %364 = vrot.lane.b32.xlu0 %v356, 96
        %v365 = vpop.permute.xlu0 %364
        %vm366 = vcmask 785408
        %v367 = vsel %vm366, %v361, %v363
        %v368 = vsel %vm366, %v363, %v365
        %v371 = vsel %vm235, %v367, 0.0
        %v372 = vsel %vm236, %v368, 0.0
        %373 = vst [vmem:[#allocation3 + $0x30] sm:$0xf] %v371
        %374 = vst [vmem:[#allocation3 + $0x38] sm:$0xf] %v372
        %v375 = vld [vmem:[#allocation2] sm:$0xff]
        %v376 = vld [vmem:[#allocation2 + $0x8] sm:$0xf]
        %v379 = vcombine.low %v375, %v375
        %v380 = vcombine.low %v376, %v376
        %381 = vrot.lane.b32.xlu0 %v379, 95
        %v382 = vpop.permute.xlu0 %381
        %383 = vrot.lane.b32.xlu0 %v375, 95
        %v384 = vpop.permute.xlu0 %383
        %385 = vrot.lane.b32.xlu0 %v380, 95
        %v386 = vpop.permute.xlu0 %385
        %vm387 = vcmask 777216
        %v388 = vsel %vm387, %v382, %v384
        %v389 = vsel %vm387, %v384, %v386
        %392 = vst [vmem:[#allocation3 + $0x30] sm:$0xf0] %v388
        %393 = vst [vmem:[#allocation3 + $0x38] sm:$0xf0] %v389
        %v394 = vld [vmem:[#allocation2] sm:$0xff]
        %v395 = vld [vmem:[#allocation2 + $0x8] sm:$0xf]
        %v398 = vcombine.high %v394, %v394
        %399 = vrot.lane.b32.xlu0 %v394, 94
        %v400 = vpop.permute.xlu0 %399
        %401 = vrot.lane.b32.xlu0 %v398, 94
        %v402 = vpop.permute.xlu0 %401
        %403 = vrot.lane.b32.xlu0 %v395, 94
        %v404 = vpop.permute.xlu0 %403
        %vm405 = vcmask 769024
        %v406 = vsel %vm405, %v400, %v402
        %v407 = vsel %vm405, %v402, %v404
        %v410 = vsel %vm265, %v406, 0.0
        %v411 = vsel %vm266, %v407, 0.0
        %412 = vst [vmem:[#allocation3 + $0x40] sm:$0xf] %v410
        %413 = vst [vmem:[#allocation3 + $0x48] sm:$0xf] %v411
        %v414 = vld [vmem:[%s1] sm:$0x7]
        %v415 = vld [vmem:[#allocation3] sm:$0xff]
        %v416 = vld [vmem:[#allocation3 + $0x8] sm:$0xff]
        %v417 = vld [vmem:[#allocation3 + $0x10] sm:$0xff]
        %v418 = vld [vmem:[#allocation3 + $0x18] sm:$0xff]
        %v419 = vld [vmem:[#allocation3 + $0x20] sm:$0xff]
        %v420 = vld [vmem:[#allocation3 + $0x28] sm:$0xff]
        %v421 = vld [vmem:[#allocation3 + $0x30] sm:$0xff]
        %v422 = vld [vmem:[#allocation3 + $0x38] sm:$0xff]
        %v423 = vld [vmem:[#allocation3 + $0x40] sm:$0xf]
        %v424 = vld [vmem:[#allocation3 + $0x48] sm:$0xf]
        %v425 = vld [vmem:[%s2] sm:$0x7]
        %427 = vset.pattern.permute.xlu0 0
        %428 = vperm.xlu0 %427, %v425
        %v429 = vpop.permute.xlu0 %428
        %vm431 = vcmask 293888
        %v433 = vsel %vm431, %v414, 0
        %vm435 = vcmask 1043456
        %v437 = vsel %vm435, %v423, 0
        %v440 = vsel %vm435, %v424, 0
        %442 = vmatprep.subr.mxu0 %v416
        %443 = vmatpush1.msra.mxu0 %v415
        %444 = vmatprep.subr.mxu0 %v418
        %445 = vmatpush1.msra.mxu0 %v417
        %446 = vmatprep.subr.mxu0 %v420
        %447 = vmatpush1.msra.mxu0 %v419
        %448 = vmatprep.subr.mxu0 %v422
        %449 = vmatpush1.msra.mxu0 %v421
        %450 = vmatprep.subr.mxu0 %v440
        %451 = vmatpush1.msra.mxu0 %v437
        %452 = vmatprep.subr.mxu0 0.0
        %453 = vmatpush1.msra.mxu0 0.0
        %454 = vmatprep.subr.mxu0 0.0
        %455 = vmatpush1.msra.mxu0 0.0
        %456 = vmatprep.subr.mxu0 0.0
        %457 = vmatpush1.msra.mxu0 0.0
        %458 = vmatprep.subr.mxu0 0.0
        %459 = vmatpush1.msra.mxu0 0.0
        %460 = vmatprep.subr.mxu0 0.0
        %461 = vmatpush1.msra.mxu0 0.0
        %462 = vmatprep.subr.mxu0 0.0
        %463 = vmatpush1.msra.mxu0 0.0
        %464 = vmatprep.subr.mxu0 0.0
        %465 = vmatpush1.msra.mxu0 0.0
        %466 = vmatprep.subr.mxu0 0.0
        %467 = vmatpush1.msra.mxu0 0.0
        %468 = vmatprep.subr.mxu0 0.0
        %469 = vmatpush1.msra.mxu0 0.0
        %470 = vmatprep.subr.mxu0 0.0
        %471 = vmatpush1.msra.mxu0 0.0
        %472 = vmatprep.subr.mxu0 0.0
        %473 = vmatpush1.msra.mxu0 0.0
        %474 = vmatprep.subr.mxu0 0.0
        %475 = vmatpush1.msra.mxu0 0.0
        %476 = vmatprep.subr.mxu0 0.0
        %477 = vmatpush1.msra.mxu0 0.0
        %478 = vmatprep.subr.mxu0 0.0
        %479 = vmatpush1.msra.mxu0 0.0
        %480 = vmatprep.subr.mxu0 0.0
        %481 = vmatpush1.msra.mxu0 0.0
        %482 = vmatprep.subr.mxu0 0.0
        %483 = vmatpush1.msra.mxu0 0.0
        %484 = vmatprep.subr.mxu0 0.0
        %485 = vmatpush1.msra.mxu0 0.0
        %486 = vmatprep.subr.mxu0 0.0
        %487 = vmatpush1.msra.mxu0 0.0
        %488 = vmatprep.subr.mxu0 0.0
        %489 = vmatpush1.msra.mxu0 0.0
        %490 = vmatprep.subr.mxu0 0.0
        %491 = vmatpush1.msra.mxu0 0.0
        %492 = vmatprep.subr.mxu0 0.0
        %493 = vmatpush1.msra.mxu0 0.0
        %494 = vmatprep.subr.mxu0 0.0
        %495 = vmatpush1.msra.mxu0 0.0
        %496 = vmatprep.subr.mxu0 0.0
        %497 = vmatpush1.msra.mxu0 0.0
        %498 = vmatprep.subr.mxu0 0.0
        %499 = vmatpush1.msra.mxu0 0.0
        %500 = vmatprep.subr.mxu0 0.0
        %501 = vmatpush1.msra.mxu0 0.0
        %502 = vmatprep.subr.mxu0 0.0
        %503 = vmatpush1.msra.mxu0 0.0
        %504 = vmatprep.subr.mxu0 0.0
        %505 = vmatpush1.msra.mxu0 0.0
        %506 = vmatprep.mubr.f32.mxu0 0.0
        %507 = vmatmul.mubr.f32.gmra.mrb[0].mxu0 %v433
        %v508 = vpop.f32.mrb[0].mxu0
        %v509 = vadd.f32 %v429, %v508
        %v510 = vpop.f32.mrb[0].mxu0
        %v511 = vadd.f32 %v429, %v510
        %512 = vdwg.mxu0
        %vm513 = vcmp.ge.f32.partialorder %v509, 0.0
        %vm514 = vcmp.ge.f32.partialorder %v511, 0.0
        %v515 = vmul.f32 %v509, 0.2
        %v516 = vmul.f32 %v511, 0.2
        %v517 = vsel %vm513, %v509, %v515
        %v518 = vsel %vm514, %v511, %v516
        %v521 = vcombine.low %v517, %v518
        %523 = vst [vmem:[%s188] sm:$0x77] %v521
        %p524 = scmp.lt.s32.totalorder %s17, 1
        %s525 = scalar_select %p524, %s17, 1
        %s526 = smul.addr %s525, 2
        %s527 = smul.addr %s526, 4
        %s528 = scalar_lea.vmem %s3, %s527
        // Predicated region
        $region37: #{tpu_custom_call.1} parent=31 // pred_check
          %p529 = pneg %p103
        $region38: #{tpu_custom_call.1} parent=31 // pred_check_branch
          %531 = sbr.rel (%p529) target = $region40
        $region39: #{tpu_custom_call.1} parent=31 // pred_region
          _
        $region40: #{tpu_custom_call.1} parent=31 // pred_fallthru
          _
      $region32: #{tpu_custom_call.1} parent=5 // pred_fallthru
        _
      %p532 = scmp.le.s32.totalorder 2, %s12
      // Predicated region
      $region41: #{tpu_custom_call.1} parent=5 // pred_check
        %p533 = pneg %p532
      $region42: #{tpu_custom_call.1} parent=5 // pred_check_branch
        %535 = sbr.rel (%p533) target = $region44
      $region43: #{tpu_custom_call.1} parent=5 // pred_region
        %s536 = ssub.s32 %s12, 2
        // Predicated region
        $region45: #{tpu_custom_call.1} parent=43 // pred_check
          %p537 = pneg %p109
        $region46: #{tpu_custom_call.1} parent=43 // pred_check_branch
          %539 = sbr.rel (%p537) target = $region48
        $region47: #{tpu_custom_call.1} parent=43 // pred_region
          %p540 = scmp.lt.s32.totalorder %s18, 1
          %s541 = scalar_select %p540, %s18, 1
          %s542 = smul.addr %s541, 2
          %s543 = smul.addr %s542, 4
          %s544 = scalar_lea.vmem %s3, %s543
        $region48: #{tpu_custom_call.1} parent=43 // pred_fallthru
          _
      $region44: #{tpu_custom_call.1} parent=5 // pred_fallthru
        _
    $region6: #{tpu_custom_call.1} parent=1 // loop_footer
      %s16 = sadd.s32 1, %s12
    $region7: #{tpu_custom_call.1} parent=1 // loop_footer_branch
      %11 = sbr.rel target = $region3
    $region8: #{tpu_custom_call.1} parent=1 // loop_exit
      _
    %545 = vsyncpa [#allocation5], 1
    %s546 = scalar_lea.sflag [#allocation5], 1
    %547 = vsyncpa %s546, 1

</llo_original>
